<compile_context>
chip_gen: v7x
topology: tpu7x:2x2x1
jax: 0.10.0
libtpu: 0.0.40
codegen_flags: <defaults>
</compile_context>

<pallas_src>
import functools

import numpy as np
import jax
import jax.numpy as jnp
from jax.experimental import pallas as pl
from jax.experimental.pallas import tpu as pltpu


def _hhagcrn_cell_kernel(xin_ref, sup_ref, emb_ref, w_ref, bias_ref, h_ref, *,
                         cheb_k, embed_dim, batch_tile, hidden, dim_in):
    K, D, TB, O = cheb_k, embed_dim, batch_tile, hidden

    xin = xin_ref[...]                               # (TB*N, C) f32
    xin_bf = xin.astype(jnp.bfloat16)

    # --- Chebyshev graph aggregation: one block-diagonal MXU matmul per k>=1
    # (the k == 0 support is the identity -> xin itself).
    xs = [xin_bf]
    for k in range(1, K):
        xg = jnp.dot(sup_ref[k - 1], xin_bf, preferred_element_type=jnp.float32)
        xs.append(xg.astype(jnp.bfloat16))
    xcat = jnp.concatenate(xs, axis=-1)              # (TB*N, K*C) bf16

    # --- tile node-wise embedding / bias across the batch tile.
    # Cheap sublane copies on VMEM-resident data; avoids passing TB- or
    # K*C-replicated operands from HBM.
    emb = emb_ref[...]                               # (N, D)    f32
    bias = bias_ref[...]                             # (N, 2*O)  f32
    if TB > 1:
        emb = jnp.concatenate([emb] * TB, axis=0)    # (TB*N, D)
        bias = jnp.concatenate([bias] * TB, axis=0)  # (TB*N, 2*O)

    # --- node-adaptive weights:  pre = bias + sum_d emb[:, d] * (xcat @ W_d)
    # Gate and update are fused along the output axis of W_d; f32 accumulate.
    pre = bias
    for d in range(D):                               # D static & small -> unrolled
        z = jnp.dot(xcat, w_ref[d], preferred_element_type=jnp.float32)
        pre = pre + emb[:, d:d + 1] * z              # (TB*N, 2*O)

    g = jax.nn.sigmoid(pre[:, :O])
    hc = jnp.tanh(pre[:, O:])
    state = xin[:, dim_in:]                          # exact f32 slice of (x ++ state)
    h_ref[...] = ((1.0 - g) * state + g * hc).astype(h_ref.dtype)


def _pick_batch_tile(B, N):
    """Batch-tile size: fill the MXU M dim (target TB*N ~ 256) while keeping
    >= 2 grid steps when possible (v7x has 2 TensorCores) and respecting the
    (8, 128) BlockSpec sublane constraint on TB*N."""
    cands = [tb for tb in range(1, B + 1) if B % tb == 0 and (tb * N) % 8 == 0]
    if not cands:
        # Single full-array block: the divisibility constraint does not apply.
        return B
    max_rows = 256
    multi = [tb for tb in cands if B // tb >= 2] or cands
    under = [tb for tb in multi if tb * N <= max_rows]
    return max(under) if under else min(multi)


def _invariant_spec(block_shape, index_map):
    """Grid-invariant operand: constant index map + single buffering (the block
    never changes, so double-buffering only wastes VMEM)."""
    try:
        return pl.BlockSpec(block_shape, index_map, pipeline_mode=pl.Buffered(1))
    except (TypeError, AttributeError):   # older jax without pipeline_mode
        return pl.BlockSpec(block_shape, index_map)


def hhagcrn_cell(x, state, c, t, node_embeddings, adj, params, *, cheb_k):
    """Pallas implementation of HHAGCRNCell.forward (x.shape[1] == node_num)."""
    del t  # unused by the PyTorch forward
    B, N, din = x.shape
    O = state.shape[-1]          # hidden dim
    C = din + O
    D = node_embeddings.shape[-1]
    K = cheb_k
    assert K >= 2, "HHAVWGCN always builds at least [I, adj] supports"

    TB = _pick_batch_tile(B, N)
    G = B // TB

    # ---- batch-invariant precompute (plain XLA, tiny) ----------------------
    xin2 = jnp.concatenate([x, state], axis=-1).astype(jnp.float32)
    xin2 = xin2.reshape(B * N, C)

    adj_f = adj.astype(jnp.float32)
    supp = [jnp.eye(N, dtype=jnp.float32), adj_f]
    for _ in range(2, K):
        supp.append(2.0 * adj_f @ supp[-1] - supp[-2])
    # Block-diagonal supports over the batch tile: one (TB*N, TB*N) matmul per
    # Chebyshev order aggregates the whole tile.  The identity support (k=0)
    # is handled implicitly in the kernel, so only k >= 1 is passed.
    eye_tb = jnp.eye(TB, dtype=jnp.float32)
    bd_sup = jnp.stack([jnp.kron(eye_tb, s) for s in supp[1:]], axis=0)
    bd_sup = bd_sup.astype(jnp.bfloat16)                          # (K-1, TB*N, TB*N)

    emb = node_embeddings.astype(jnp.float32)                     # (N, D)
    # PyTorch pools are (D, K, C, O): a row-major reshape keeps the (k, i) row
    # ordering that matches the kernel's xcat column layout (no transpose).
    wg = params['gate_weights_pool'].astype(jnp.float32).reshape(D, K * C, O)
    wu = params['update_weights_pool'].astype(jnp.float32).reshape(D, K * C, O)
    w_stack = jnp.concatenate([wg, wu], axis=-1).astype(jnp.bfloat16)  # (D, K*C, 2O)
    bias = jnp.concatenate(
        [emb @ params['gate_bias_pool'].astype(jnp.float32),
         emb @ params['update_bias_pool'].astype(jnp.float32)], axis=-1)  # (N, 2O)

    kernel = functools.partial(_hhagcrn_cell_kernel, cheb_k=K, embed_dim=D,
                               batch_tile=TB, hidden=O, dim_in=din)

    h2 = pl.pallas_call(
        kernel,
        out_shape=jax.ShapeDtypeStruct((B * N, O), x.dtype),
        grid=(G,),
        in_specs=[
            pl.BlockSpec((TB * N, C), lambda b: (b, 0)),
            _invariant_spec((K - 1, TB * N, TB * N), lambda b: (0, 0, 0)),
            _invariant_spec((N, D), lambda b: (0, 0)),
            _invariant_spec((D, K * C, 2 * O), lambda b: (0, 0, 0)),
            _invariant_spec((N, 2 * O), lambda b: (0, 0)),
        ],
        out_specs=pl.BlockSpec((TB * N, O), lambda b: (b, 0)),
        compiler_params=pltpu.CompilerParams(
            dimension_semantics=("parallel",),
            vmem_limit_bytes=32 * 1024 * 1024),
    )(xin2, bd_sup, emb, w_stack, bias)

    # c is returned unchanged by the PyTorch cell.
    return h2.reshape(B, N, O), c


# ---------------------------- pure-JAX reference ----------------------------
def _hhavwgcn_ref(x, node_embeddings, adj, weights_pool, bias_pool, cheb_k):
    n = adj.shape[0]
    eye = jnp.eye(n, dtype=adj.dtype)
    support_set = [eye, adj]
    for _ in range(2, cheb_k):
        support_set.append(2.0 * adj @ support_set[-1] - support_set[-2])
    supports = jnp.stack(support_set, axis=0)                       # (K, N, N)
    weights = jnp.einsum('nd,dkio->nkio', node_embeddings, weights_pool)
    bias = node_embeddings @ bias_pool
    x_g = jnp.einsum('knm,bmc->bknc', supports, x)
    x_g = jnp.transpose(x_g, (0, 2, 1, 3))                          # (B, N, K, C)
    return jnp.einsum('bnki,nkio->bno', x_g, weights) + bias


def hhagcrn_cell_ref(x, state, c, t, node_embeddings, adj, params, cheb_k):
    del t
    xin = jnp.concatenate([x, state], axis=-1)
    g = jax.nn.sigmoid(_hhavwgcn_ref(xin, node_embeddings, adj,
                                     params['gate_weights_pool'],
                                     params['gate_bias_pool'], cheb_k))
    hc = jnp.tanh(_hhavwgcn_ref(xin, node_embeddings, adj,
                                params['update_weights_pool'],
                                params['update_bias_pool'], cheb_k))
    h = (1.0 - g) * state + g * hc
    return h, c


if __name__ == "__main__":
    B, N, DIN, HID, CHEB_K, EMBED, ORDER = 2, 16, 4, 32, 3, 8, 4
    C = DIN + HID

    key = jax.random.PRNGKey(0)
    ks = jax.random.split(key, 8)
    x = jax.random.normal(ks[0], (B, N, DIN), jnp.float32)
    state = jax.random.normal(ks[1], (B, N, HID), jnp.float32) * 0.5
    c = jnp.zeros((B, N, ORDER), jnp.float32)
    t = 0
    node_embeddings = jax.random.normal(ks[2], (N, EMBED), jnp.float32) * 0.3
    adj_raw = jax.random.uniform(ks[3], (N, N), jnp.float32)
    adj = 0.5 * (adj_raw + adj_raw.T) / N  # symmetric, modest magnitude

    params = {
        'gate_weights_pool':
            jax.random.normal(ks[4], (EMBED, CHEB_K, C, HID), jnp.float32) * 0.1,
        'gate_bias_pool':
            jax.random.normal(ks[5], (EMBED, HID), jnp.float32) * 0.1,
        'update_weights_pool':
            jax.random.normal(ks[6], (EMBED, CHEB_K, C, HID), jnp.float32) * 0.1,
        'update_bias_pool':
            jax.random.normal(ks[7], (EMBED, HID), jnp.float32) * 0.1,
    }

    cell = jax.jit(functools.partial(hhagcrn_cell, cheb_k=CHEB_K))
    h, c_out = cell(x, state, c, t, node_embeddings, adj, params)
    jax.block_until_ready(h)

    h_ref, _ = hhagcrn_cell_ref(x, state, c, t, node_embeddings, adj, params,
                                CHEB_K)
    np.testing.assert_allclose(np.asarray(h), np.asarray(h_ref),
                               atol=2e-2, rtol=2e-2)

    print("KERNEL_OK")
</pallas_src>

<mosaic_0001>
module attributes {stable_mosaic.version = 11 : i64} {
  func.func @_hhagcrn_cell_kernel(%arg0: i32, %arg1: memref<16x36xf32, #tpu.memory_space<vmem>>, %arg2: memref<2x16x16xbf16, #tpu.memory_space<vmem>>, %arg3: memref<16x8xf32, #tpu.memory_space<vmem>>, %arg4: memref<8x108x64xbf16, #tpu.memory_space<vmem>>, %arg5: memref<16x64xf32, #tpu.memory_space<vmem>>, %arg6: memref<16x32xf32, #tpu.memory_space<vmem>>) attributes {dimension_semantics = [#tpu.dimension_semantics<parallel>], iteration_bounds = array<i64: 2>, scalar_prefetch = 0 : i64, scratch_operands = 0 : i64, tpu.core_type = #tpu.core_type<tc>, window_params = [{transform_indices = @transform_0, window_bounds = array<i64: 16, 36>}, {pipeline_mode = #tpu.pipeline_mode<synchronous>, transform_indices = @transform_1, window_bounds = array<i64: 2, 16, 16>}, {pipeline_mode = #tpu.pipeline_mode<synchronous>, transform_indices = @transform_2, window_bounds = array<i64: 16, 8>}, {pipeline_mode = #tpu.pipeline_mode<synchronous>, transform_indices = @transform_3, window_bounds = array<i64: 8, 108, 64>}, {pipeline_mode = #tpu.pipeline_mode<synchronous>, transform_indices = @transform_4, window_bounds = array<i64: 16, 64>}, {transform_indices = @transform_5, window_bounds = array<i64: 16, 32>}]} {
    %c0 = arith.constant 0 : index
    %c0_0 = arith.constant 0 : index
    %0 = vector.load %arg1[%c0, %c0_0] : memref<16x36xf32, #tpu.memory_space<vmem>>, vector<16x36xf32>
    %1 = arith.truncf %0 : vector<16x36xf32> to vector<16x36xbf16>
    %c0_1 = arith.constant 0 : index
    %c0_2 = arith.constant 0 : index
    %c0_3 = arith.constant 0 : index
    %2 = vector.load %arg2[%c0_1, %c0_2, %c0_3] : memref<2x16x16xbf16, #tpu.memory_space<vmem>>, vector<1x16x16xbf16>
    %3 = vector.shape_cast %2 : vector<1x16x16xbf16> to vector<16x16xbf16>
    %cst = arith.constant dense<0.000000e+00> : vector<16x36xf32>
    %4 = tpu.matmul %3, %1, %cst {dimension_numbers = #tpu.dot_dimension_numbers<[1], [0], [0], [1], [0, 0, 1, 1], [], []>} : vector<16x16xbf16>, vector<16x36xbf16>, vector<16x36xf32> -> vector<16x36xf32>
    %5 = arith.truncf %4 : vector<16x36xf32> to vector<16x36xbf16>
    %c1 = arith.constant 1 : index
    %c0_4 = arith.constant 0 : index
    %c0_5 = arith.constant 0 : index
    %6 = vector.load %arg2[%c1, %c0_4, %c0_5] : memref<2x16x16xbf16, #tpu.memory_space<vmem>>, vector<1x16x16xbf16>
    %7 = vector.shape_cast %6 : vector<1x16x16xbf16> to vector<16x16xbf16>
    %cst_6 = arith.constant dense<0.000000e+00> : vector<16x36xf32>
    %8 = tpu.matmul %7, %1, %cst_6 {dimension_numbers = #tpu.dot_dimension_numbers<[1], [0], [0], [1], [0, 0, 1, 1], [], []>} : vector<16x16xbf16>, vector<16x36xbf16>, vector<16x36xf32> -> vector<16x36xf32>
    %9 = arith.truncf %8 : vector<16x36xf32> to vector<16x36xbf16>
    %10 = tpu.concatenate %1, %5, %9 in 1 : vector<16x36xbf16>, vector<16x36xbf16>, vector<16x36xbf16> -> vector<16x108xbf16>
    %c0_7 = arith.constant 0 : index
    %c0_8 = arith.constant 0 : index
    %11 = vector.load %arg3[%c0_7, %c0_8] : memref<16x8xf32, #tpu.memory_space<vmem>>, vector<16x8xf32>
    %c0_9 = arith.constant 0 : index
    %c0_10 = arith.constant 0 : index
    %12 = vector.load %arg5[%c0_9, %c0_10] : memref<16x64xf32, #tpu.memory_space<vmem>>, vector<16x64xf32>
    %c0_11 = arith.constant 0 : index
    %c0_12 = arith.constant 0 : index
    %c0_13 = arith.constant 0 : index
    %13 = vector.load %arg4[%c0_11, %c0_12, %c0_13] : memref<8x108x64xbf16, #tpu.memory_space<vmem>>, vector<1x108x64xbf16>
    %14 = vector.shape_cast %13 : vector<1x108x64xbf16> to vector<108x64xbf16>
    %cst_14 = arith.constant dense<0.000000e+00> : vector<16x64xf32>
    %15 = tpu.matmul %10, %14, %cst_14 {dimension_numbers = #tpu.dot_dimension_numbers<[1], [0], [0], [1], [0, 0, 1, 1], [], []>} : vector<16x108xbf16>, vector<108x64xbf16>, vector<16x64xf32> -> vector<16x64xf32>
    %16 = vector.extract_strided_slice %11 {offsets = [0, 0], sizes = [16, 1], strides = [1, 1]} : vector<16x8xf32> to vector<16x1xf32>
    %17 = vector.broadcast %16 : vector<16x1xf32> to vector<16x64xf32>
    %18 = arith.mulf %17, %15 : vector<16x64xf32>
    %19 = arith.addf %12, %18 : vector<16x64xf32>
    %c1_15 = arith.constant 1 : index
    %c0_16 = arith.constant 0 : index
    %c0_17 = arith.constant 0 : index
    %20 = vector.load %arg4[%c1_15, %c0_16, %c0_17] : memref<8x108x64xbf16, #tpu.memory_space<vmem>>, vector<1x108x64xbf16>
    %21 = vector.shape_cast %20 : vector<1x108x64xbf16> to vector<108x64xbf16>
    %cst_18 = arith.constant dense<0.000000e+00> : vector<16x64xf32>
    %22 = tpu.matmul %10, %21, %cst_18 {dimension_numbers = #tpu.dot_dimension_numbers<[1], [0], [0], [1], [0, 0, 1, 1], [], []>} : vector<16x108xbf16>, vector<108x64xbf16>, vector<16x64xf32> -> vector<16x64xf32>
    %23 = vector.extract_strided_slice %11 {offsets = [0, 1], sizes = [16, 1], strides = [1, 1]} : vector<16x8xf32> to vector<16x1xf32>
    %24 = vector.broadcast %23 : vector<16x1xf32> to vector<16x64xf32>
    %25 = arith.mulf %24, %22 : vector<16x64xf32>
    %26 = arith.addf %19, %25 : vector<16x64xf32>
    %c2 = arith.constant 2 : index
    %c0_19 = arith.constant 0 : index
    %c0_20 = arith.constant 0 : index
    %27 = vector.load %arg4[%c2, %c0_19, %c0_20] : memref<8x108x64xbf16, #tpu.memory_space<vmem>>, vector<1x108x64xbf16>
    %28 = vector.shape_cast %27 : vector<1x108x64xbf16> to vector<108x64xbf16>
    %cst_21 = arith.constant dense<0.000000e+00> : vector<16x64xf32>
    %29 = tpu.matmul %10, %28, %cst_21 {dimension_numbers = #tpu.dot_dimension_numbers<[1], [0], [0], [1], [0, 0, 1, 1], [], []>} : vector<16x108xbf16>, vector<108x64xbf16>, vector<16x64xf32> -> vector<16x64xf32>
    %30 = vector.extract_strided_slice %11 {offsets = [0, 2], sizes = [16, 1], strides = [1, 1]} : vector<16x8xf32> to vector<16x1xf32>
    %31 = vector.broadcast %30 : vector<16x1xf32> to vector<16x64xf32>
    %32 = arith.mulf %31, %29 : vector<16x64xf32>
    %33 = arith.addf %26, %32 : vector<16x64xf32>
    %c3 = arith.constant 3 : index
    %c0_22 = arith.constant 0 : index
    %c0_23 = arith.constant 0 : index
    %34 = vector.load %arg4[%c3, %c0_22, %c0_23] : memref<8x108x64xbf16, #tpu.memory_space<vmem>>, vector<1x108x64xbf16>
    %35 = vector.shape_cast %34 : vector<1x108x64xbf16> to vector<108x64xbf16>
    %cst_24 = arith.constant dense<0.000000e+00> : vector<16x64xf32>
    %36 = tpu.matmul %10, %35, %cst_24 {dimension_numbers = #tpu.dot_dimension_numbers<[1], [0], [0], [1], [0, 0, 1, 1], [], []>} : vector<16x108xbf16>, vector<108x64xbf16>, vector<16x64xf32> -> vector<16x64xf32>
    %37 = vector.extract_strided_slice %11 {offsets = [0, 3], sizes = [16, 1], strides = [1, 1]} : vector<16x8xf32> to vector<16x1xf32>
    %38 = vector.broadcast %37 : vector<16x1xf32> to vector<16x64xf32>
    %39 = arith.mulf %38, %36 : vector<16x64xf32>
    %40 = arith.addf %33, %39 : vector<16x64xf32>
    %c4 = arith.constant 4 : index
    %c0_25 = arith.constant 0 : index
    %c0_26 = arith.constant 0 : index
    %41 = vector.load %arg4[%c4, %c0_25, %c0_26] : memref<8x108x64xbf16, #tpu.memory_space<vmem>>, vector<1x108x64xbf16>
    %42 = vector.shape_cast %41 : vector<1x108x64xbf16> to vector<108x64xbf16>
    %cst_27 = arith.constant dense<0.000000e+00> : vector<16x64xf32>
    %43 = tpu.matmul %10, %42, %cst_27 {dimension_numbers = #tpu.dot_dimension_numbers<[1], [0], [0], [1], [0, 0, 1, 1], [], []>} : vector<16x108xbf16>, vector<108x64xbf16>, vector<16x64xf32> -> vector<16x64xf32>
    %44 = vector.extract_strided_slice %11 {offsets = [0, 4], sizes = [16, 1], strides = [1, 1]} : vector<16x8xf32> to vector<16x1xf32>
    %45 = vector.broadcast %44 : vector<16x1xf32> to vector<16x64xf32>
    %46 = arith.mulf %45, %43 : vector<16x64xf32>
    %47 = arith.addf %40, %46 : vector<16x64xf32>
    %c5 = arith.constant 5 : index
    %c0_28 = arith.constant 0 : index
    %c0_29 = arith.constant 0 : index
    %48 = vector.load %arg4[%c5, %c0_28, %c0_29] : memref<8x108x64xbf16, #tpu.memory_space<vmem>>, vector<1x108x64xbf16>
    %49 = vector.shape_cast %48 : vector<1x108x64xbf16> to vector<108x64xbf16>
    %cst_30 = arith.constant dense<0.000000e+00> : vector<16x64xf32>
    %50 = tpu.matmul %10, %49, %cst_30 {dimension_numbers = #tpu.dot_dimension_numbers<[1], [0], [0], [1], [0, 0, 1, 1], [], []>} : vector<16x108xbf16>, vector<108x64xbf16>, vector<16x64xf32> -> vector<16x64xf32>
    %51 = vector.extract_strided_slice %11 {offsets = [0, 5], sizes = [16, 1], strides = [1, 1]} : vector<16x8xf32> to vector<16x1xf32>
    %52 = vector.broadcast %51 : vector<16x1xf32> to vector<16x64xf32>
    %53 = arith.mulf %52, %50 : vector<16x64xf32>
    %54 = arith.addf %47, %53 : vector<16x64xf32>
    %c6 = arith.constant 6 : index
    %c0_31 = arith.constant 0 : index
    %c0_32 = arith.constant 0 : index
    %55 = vector.load %arg4[%c6, %c0_31, %c0_32] : memref<8x108x64xbf16, #tpu.memory_space<vmem>>, vector<1x108x64xbf16>
    %56 = vector.shape_cast %55 : vector<1x108x64xbf16> to vector<108x64xbf16>
    %cst_33 = arith.constant dense<0.000000e+00> : vector<16x64xf32>
    %57 = tpu.matmul %10, %56, %cst_33 {dimension_numbers = #tpu.dot_dimension_numbers<[1], [0], [0], [1], [0, 0, 1, 1], [], []>} : vector<16x108xbf16>, vector<108x64xbf16>, vector<16x64xf32> -> vector<16x64xf32>
    %58 = vector.extract_strided_slice %11 {offsets = [0, 6], sizes = [16, 1], strides = [1, 1]} : vector<16x8xf32> to vector<16x1xf32>
    %59 = vector.broadcast %58 : vector<16x1xf32> to vector<16x64xf32>
    %60 = arith.mulf %59, %57 : vector<16x64xf32>
    %61 = arith.addf %54, %60 : vector<16x64xf32>
    %c7 = arith.constant 7 : index
    %c0_34 = arith.constant 0 : index
    %c0_35 = arith.constant 0 : index
    %62 = vector.load %arg4[%c7, %c0_34, %c0_35] : memref<8x108x64xbf16, #tpu.memory_space<vmem>>, vector<1x108x64xbf16>
    %63 = vector.shape_cast %62 : vector<1x108x64xbf16> to vector<108x64xbf16>
    %cst_36 = arith.constant dense<0.000000e+00> : vector<16x64xf32>
    %64 = tpu.matmul %10, %63, %cst_36 {dimension_numbers = #tpu.dot_dimension_numbers<[1], [0], [0], [1], [0, 0, 1, 1], [], []>} : vector<16x108xbf16>, vector<108x64xbf16>, vector<16x64xf32> -> vector<16x64xf32>
    %65 = vector.extract_strided_slice %11 {offsets = [0, 7], sizes = [16, 1], strides = [1, 1]} : vector<16x8xf32> to vector<16x1xf32>
    %66 = vector.broadcast %65 : vector<16x1xf32> to vector<16x64xf32>
    %67 = arith.mulf %66, %64 : vector<16x64xf32>
    %68 = arith.addf %61, %67 : vector<16x64xf32>
    %69 = vector.extract_strided_slice %68 {offsets = [0, 0], sizes = [16, 32], strides = [1, 1]} : vector<16x64xf32> to vector<16x32xf32>
    %70 = arith.negf %69 : vector<16x32xf32>
    %71 = math.exp %70 : vector<16x32xf32>
    %cst_37 = arith.constant 1.000000e+00 : f32
    %72 = vector.broadcast %cst_37 : f32 to vector<16x32xf32>
    %73 = arith.addf %72, %71 : vector<16x32xf32>
    %74 = arith.divf %72, %73 : vector<16x32xf32>
    %75 = vector.extract_strided_slice %68 {offsets = [0, 32], sizes = [16, 32], strides = [1, 1]} : vector<16x64xf32> to vector<16x32xf32>
    %76 = math.tanh %75 : vector<16x32xf32>
    %77 = vector.extract_strided_slice %0 {offsets = [0, 4], sizes = [16, 32], strides = [1, 1]} : vector<16x36xf32> to vector<16x32xf32>
    %cst_38 = arith.constant 1.000000e+00 : f32
    %78 = vector.broadcast %cst_38 : f32 to vector<16x32xf32>
    %79 = arith.subf %78, %74 : vector<16x32xf32>
    %80 = arith.mulf %79, %77 : vector<16x32xf32>
    %81 = arith.mulf %74, %76 : vector<16x32xf32>
    %82 = arith.addf %80, %81 : vector<16x32xf32>
    %c0_39 = arith.constant 0 : index
    %c0_40 = arith.constant 0 : index
    %83 = vector.load %arg6[%c0_39, %c0_40] : memref<16x32xf32, #tpu.memory_space<vmem>>, vector<16x32xf32>
    tpu.vector_store %arg6[%c0_39, %c0_40], %82 {strides = array<i32>} : memref<16x32xf32, #tpu.memory_space<vmem>>, vector<16x32xf32>,
    return
  }
  func.func @transform_0(%arg0: i32) -> (i32, i32) {
    %c0_i32 = arith.constant 0 : i32
    %c0_i32_0 = arith.constant 0 : i32
    return %arg0, %c0_i32 : i32, i32
  }
  func.func @transform_1(%arg0: i32) -> (i32, i32, i32) {
    %c0_i32 = arith.constant 0 : i32
    %c0_i32_0 = arith.constant 0 : i32
    %c0_i32_1 = arith.constant 0 : i32
    %c0_i32_2 = arith.constant 0 : i32
    return %c0_i32, %c0_i32_0, %c0_i32_1 : i32, i32, i32
  }
  func.func @transform_2(%arg0: i32) -> (i32, i32) {
    %c0_i32 = arith.constant 0 : i32
    %c0_i32_0 = arith.constant 0 : i32
    %c0_i32_1 = arith.constant 0 : i32
    return %c0_i32, %c0_i32_0 : i32, i32
  }
  func.func @transform_3(%arg0: i32) -> (i32, i32, i32) {
    %c0_i32 = arith.constant 0 : i32
    %c0_i32_0 = arith.constant 0 : i32
    %c0_i32_1 = arith.constant 0 : i32
    %c0_i32_2 = arith.constant 0 : i32
    return %c0_i32, %c0_i32_0, %c0_i32_1 : i32, i32, i32
  }
  func.func @transform_4(%arg0: i32) -> (i32, i32) {
    %c0_i32 = arith.constant 0 : i32
    %c0_i32_0 = arith.constant 0 : i32
    %c0_i32_1 = arith.constant 0 : i32
    return %c0_i32, %c0_i32_0 : i32, i32
  }
  func.func @transform_5(%arg0: i32) -> (i32, i32) {
    %c0_i32 = arith.constant 0 : i32
    %c0_i32_0 = arith.constant 0 : i32
    return %arg0, %c0_i32 : i32, i32
  }
}

</mosaic_0001>

<llo_original>
// kernel: hhagcrn_cell.1
$region0: #{hhagcrn_cell.1}
  #allocation0 [shape = 'u32[]', space=smem, size = 0x4, offset = 0x4, fixed_abs, tag = 'smem constant byte address 0x4 - core index']
  #allocation1 [shape = 'u32[144,128]{1,0:T(1,128)}', space=vmem, size = 0x12000, scoped, tag = 'internal scratch']
  %s0 = inlined_call_operand.vmem [shape: f32[32,36], index: 0, kind: input, shape index: {}]
  %s1 = inlined_call_operand.vmem [shape: bf16[2,16,16], index: 1, kind: input, shape index: {}]
  %s2 = inlined_call_operand.vmem [shape: f32[16,8], index: 2, kind: input, shape index: {}]
  %s3 = inlined_call_operand.vmem [shape: bf16[8,108,64], index: 3, kind: input, shape index: {}]
  %s4 = inlined_call_operand.vmem [shape: f32[16,64], index: 4, kind: input, shape index: {}]
  %s5 = inlined_call_operand.hbm [shape: f32[32,32], index: 5, kind: output, shape index: {}]
  %s6 = sld [smem:[#allocation0]]
  $region53: #{hhagcrn_cell.1} parent=0
    _
  %s8 = ssub.s32 1, %s6
  %s9 = scalar_select 0, %s8, %s6
  $region1: #{hhagcrn_cell.1} parent=0
    #allocation2 [shape = 'u8[16384]{0}', space=vmem, size = 0x4000, scoped, tag = 'output window, operand 0']
    #allocation3 [shape = 's32[2]{0}', space=sflag, size = 0x8, scoped, tag = 'scoped memory for hhagcrn_cell.1']
    %10 = vsyncpa [#allocation3], 0
    %s11 = scalar_lea.sflag [#allocation3], 1
    %12 = vsyncpa %s11, 0
    loop: start=0, step=1, limit=4
    $region2: #{hhagcrn_cell.1} parent=1 // loop_pre_header
      _
    $region3: #{hhagcrn_cell.1} parent=1 // loop_header
      %s14 = sphi 0, %s18
      %p15 = scmp.ge.s32.totalorder %s14, 4
      %s24 = sphi 0, %s26
      %s27 = sphi 0, %s24
      %s28 = sphi 0, %s27
      %s44 = sphi 0, %s28
      %s48 = sphi 0, %s48
      %s50 = sphi 0, %s48
      %s51 = sphi 0, %s50
      %s65 = sphi 0, %s51
      %s69 = sphi 0, %s69
      %s71 = sphi 0, %s69
      %s72 = sphi 0, %s71
      %s86 = sphi 0, %s72
      %s90 = sphi 0, %s90
      %s92 = sphi 0, %s90
      %s93 = sphi 0, %s92
      %s107 = sphi 0, %s93
      %s111 = sphi 0, %s111
      %s113 = sphi 0, %s111
      %s114 = sphi 0, %s113
      %s128 = sphi 0, %s114
      %s134 = sphi 0, %s136
      %s137 = sphi 0, %s134
      %s138 = sphi 0, %s137
      %s154 = sphi 0, %s138
    $region4: #{hhagcrn_cell.1} parent=1 // loop_header_branch
      %17 = sbr.rel (%p15) target = $region8
    $region5: #{hhagcrn_cell.1} parent=1 // loop_body
      %s19 = ssub.s32 %s14, 1
      %s20 = ssub.s32 %s14, 2
      %s21 = sadd.s32 %s14, 1
      %s22 = ssub.s32 %s14, %s21
      %p23 = scmp.eq.s32.totalorder %s22, 0
      %s25 = sadd.s32 %s24, 1
      %s26 = scalar_select %p23, %s24, %s25
      %p29 = pneg %p23
      %p30 = scmp.eq.s32.totalorder %s14, 1
      %p31 = por %p29, %p30
      %p32 = scmp.ne.s32.totalorder %s24, %s27
      %p33 = scmp.eq.s32.totalorder %s14, 0
      %p34 = por %p32, %p33
      %p35 = scmp.ne.s32.totalorder %s24, %s27
      %p36 = scmp.eq.s32.totalorder %s19, 1
      %p37 = por %p35, %p36
      %p38 = scmp.ne.s32.totalorder %s27, %s28
      %p39 = scmp.eq.s32.totalorder %s19, 0
      %p40 = por %p38, %p39
      %p41 = scmp.ne.s32.totalorder %s27, %s28
      %p42 = scmp.eq.s32.totalorder %s20, 1
      %p43 = por %p41, %p42
      %p45 = scmp.ne.s32.totalorder %s28, %s44
      %p46 = scmp.eq.s32.totalorder %s20, 0
      %p47 = por %p45, %p46
      %s49 = sadd.s32 %s48, 1
      %p52 = scmp.eq.s32.totalorder %s14, 1
      %p53 = scmp.ne.s32.totalorder %s48, %s50
      %p54 = scmp.eq.s32.totalorder %s14, 0
      %p55 = por %p53, %p54
      %p56 = scmp.ne.s32.totalorder %s48, %s50
      %p57 = scmp.eq.s32.totalorder %s19, 1
      %p58 = por %p56, %p57
      %p59 = scmp.ne.s32.totalorder %s50, %s51
      %p60 = scmp.eq.s32.totalorder %s19, 0
      %p61 = por %p59, %p60
      %p62 = scmp.ne.s32.totalorder %s50, %s51
      %p63 = scmp.eq.s32.totalorder %s20, 1
      %p64 = por %p62, %p63
      %p66 = scmp.ne.s32.totalorder %s51, %s65
      %p67 = scmp.eq.s32.totalorder %s20, 0
      %p68 = por %p66, %p67
      %s70 = sadd.s32 %s69, 1
      %p73 = scmp.eq.s32.totalorder %s14, 1
      %p74 = scmp.ne.s32.totalorder %s69, %s71
      %p75 = scmp.eq.s32.totalorder %s14, 0
      %p76 = por %p74, %p75
      %p77 = scmp.ne.s32.totalorder %s69, %s71
      %p78 = scmp.eq.s32.totalorder %s19, 1
      %p79 = por %p77, %p78
      %p80 = scmp.ne.s32.totalorder %s71, %s72
      %p81 = scmp.eq.s32.totalorder %s19, 0
      %p82 = por %p80, %p81
      %p83 = scmp.ne.s32.totalorder %s71, %s72
      %p84 = scmp.eq.s32.totalorder %s20, 1
      %p85 = por %p83, %p84
      %p87 = scmp.ne.s32.totalorder %s72, %s86
      %p88 = scmp.eq.s32.totalorder %s20, 0
      %p89 = por %p87, %p88
      %s91 = sadd.s32 %s90, 1
      %p94 = scmp.eq.s32.totalorder %s14, 1
      %p95 = scmp.ne.s32.totalorder %s90, %s92
      %p96 = scmp.eq.s32.totalorder %s14, 0
      %p97 = por %p95, %p96
      %p98 = scmp.ne.s32.totalorder %s90, %s92
      %p99 = scmp.eq.s32.totalorder %s19, 1
      %p100 = por %p98, %p99
      %p101 = scmp.ne.s32.totalorder %s92, %s93
      %p102 = scmp.eq.s32.totalorder %s19, 0
      %p103 = por %p101, %p102
      %p104 = scmp.ne.s32.totalorder %s92, %s93
      %p105 = scmp.eq.s32.totalorder %s20, 1
      %p106 = por %p104, %p105
      %p108 = scmp.ne.s32.totalorder %s93, %s107
      %p109 = scmp.eq.s32.totalorder %s20, 0
      %p110 = por %p108, %p109
      %s112 = sadd.s32 %s111, 1
      %p115 = scmp.eq.s32.totalorder %s14, 1
      %p116 = scmp.ne.s32.totalorder %s111, %s113
      %p117 = scmp.eq.s32.totalorder %s14, 0
      %p118 = por %p116, %p117
      %p119 = scmp.ne.s32.totalorder %s111, %s113
      %p120 = scmp.eq.s32.totalorder %s19, 1
      %p121 = por %p119, %p120
      %p122 = scmp.ne.s32.totalorder %s113, %s114
      %p123 = scmp.eq.s32.totalorder %s19, 0
      %p124 = por %p122, %p123
      %p125 = scmp.ne.s32.totalorder %s113, %s114
      %p126 = scmp.eq.s32.totalorder %s20, 1
      %p127 = por %p125, %p126
      %p129 = scmp.ne.s32.totalorder %s114, %s128
      %p130 = scmp.eq.s32.totalorder %s20, 0
      %p131 = por %p129, %p130
      %s132 = ssub.s32 %s14, %s21
      %p133 = scmp.eq.s32.totalorder %s132, 0
      %s135 = sadd.s32 %s134, 1
      %s136 = scalar_select %p133, %s134, %s135
      %p139 = pneg %p133
      %p140 = scmp.eq.s32.totalorder %s14, 1
      %p141 = por %p139, %p140
      %p142 = scmp.ne.s32.totalorder %s134, %s137
      %p143 = scmp.eq.s32.totalorder %s14, 0
      %p144 = por %p142, %p143
      %p145 = scmp.ne.s32.totalorder %s134, %s137
      %p146 = scmp.eq.s32.totalorder %s19, 1
      %p147 = por %p145, %p146
      %p148 = scmp.ne.s32.totalorder %s137, %s138
      %p149 = scmp.eq.s32.totalorder %s19, 0
      %p150 = por %p148, %p149
      %p151 = scmp.ne.s32.totalorder %s137, %s138
      %p152 = scmp.eq.s32.totalorder %s20, 1
      %p153 = por %p151, %p152
      %p155 = scmp.ne.s32.totalorder %s138, %s154
      %p156 = scmp.eq.s32.totalorder %s20, 0
      %p157 = por %p155, %p156
      %p158 = scmp.le.s32.totalorder 1, %s14
      %p159 = scmp.lt.s32.totalorder %s14, 3
      %p160 = pnand %p158, %p159
      %p161 = pneg %p160
      // Predicated region
      $region9: #{hhagcrn_cell.1} parent=5 // pred_check
        _
      $region10: #{hhagcrn_cell.1} parent=5 // pred_check_branch
        %163 = sbr.rel (%p160) target = $region12
      $region11: #{hhagcrn_cell.1} parent=5 // pred_region
        %s164 = ssub.s32 %s14, 1
        // Predicated region
        $region13: #{hhagcrn_cell.1} parent=11 // pred_check
          %p165 = pneg %p61
        $region14: #{hhagcrn_cell.1} parent=11 // pred_check_branch
          %167 = sbr.rel (%p165) target = $region16
        $region15: #{hhagcrn_cell.1} parent=11 // pred_region
          _
        $region16: #{hhagcrn_cell.1} parent=11 // pred_fallthru
          _
        // Predicated region
        $region17: #{hhagcrn_cell.1} parent=11 // pred_check
          %p168 = pneg %p82
        $region18: #{hhagcrn_cell.1} parent=11 // pred_check_branch
          %170 = sbr.rel (%p168) target = $region20
        $region19: #{hhagcrn_cell.1} parent=11 // pred_region
          _
        $region20: #{hhagcrn_cell.1} parent=11 // pred_fallthru
          _
        // Predicated region
        $region21: #{hhagcrn_cell.1} parent=11 // pred_check
          %p171 = pneg %p103
        $region22: #{hhagcrn_cell.1} parent=11 // pred_check_branch
          %173 = sbr.rel (%p171) target = $region24
        $region23: #{hhagcrn_cell.1} parent=11 // pred_region
          _
        $region24: #{hhagcrn_cell.1} parent=11 // pred_fallthru
          _
        // Predicated region
        $region25: #{hhagcrn_cell.1} parent=11 // pred_check
          %p174 = pneg %p124
        $region26: #{hhagcrn_cell.1} parent=11 // pred_check_branch
          %176 = sbr.rel (%p174) target = $region28
        $region27: #{hhagcrn_cell.1} parent=11 // pred_region
          _
        $region28: #{hhagcrn_cell.1} parent=11 // pred_fallthru
          _
      $region12: #{hhagcrn_cell.1} parent=5 // pred_fallthru
        _
      %p177 = scmp.lt.s32.totalorder %s14, 2
      // Predicated region
      $region29: #{hhagcrn_cell.1} parent=5 // pred_check
        %p178 = pneg %p177
      $region30: #{hhagcrn_cell.1} parent=5 // pred_check_branch
        %180 = sbr.rel (%p178) target = $region32
      $region31: #{hhagcrn_cell.1} parent=5 // pred_region
        // Predicated region
        $region33: #{hhagcrn_cell.1} parent=31 // pred_check
          %p181 = pneg %p34
        $region34: #{hhagcrn_cell.1} parent=31 // pred_check_branch
          %183 = sbr.rel (%p181) target = $region36
        $region35: #{hhagcrn_cell.1} parent=31 // pred_region
          %s184 = smul.u32 2, %s14
          %p185 = scmp.lt.s32.totalorder %s184, 3
          %s186 = scalar_select %p185, %s184, 3
          %s187 = smul.addr %s186, 8
          %s188 = scalar_lea.vmem %s0, %s187
          %s189 = smul.u32 2, %s14
        $region36: #{hhagcrn_cell.1} parent=31 // pred_fallthru
          _
      $region32: #{hhagcrn_cell.1} parent=5 // pred_fallthru
        _
      %p190 = scmp.le.s32.totalorder 1, %s14
      %p191 = scmp.lt.s32.totalorder %s14, 3
      %p192 = pnand %p190, %p191
      %p193 = pneg %p192
      // Predicated region
      $region37: #{hhagcrn_cell.1} parent=5 // pred_check
        _
      $region38: #{hhagcrn_cell.1} parent=5 // pred_check_branch
        %195 = sbr.rel (%p192) target = $region40
      $region39: #{hhagcrn_cell.1} parent=5 // pred_region
        %s196 = ssub.s32 %s14, 1
        %s197 = smul.u32 2, %s19
        %p198 = scmp.lt.s32.totalorder %s197, 3
        %s199 = scalar_select %p198, %s197, 3
        %s200 = smul.addr %s199, 8
        %s201 = scalar_lea.vmem %s0, %s200
        %p202 = pneg %p40
        %p203 = pneg %p37
        %p204 = pneg %p61
        %p205 = pneg %p58
        %p206 = pneg %p82
        %p207 = pneg %p79
        %p208 = pneg %p103
        %p209 = pneg %p100
        %p210 = pneg %p124
        %p211 = pneg %p121
        %p212 = pneg %p150
        %p213 = pneg %p147
        %s214 = sand.u32 %s137, 1
        %s215 = scalar_lea.sflag [#allocation3], %s214
        %s216 = sand.u32 %s137, 1
        %s217 = smul.addr %s216, 16
        %s218 = scalar_lea.vmem [#allocation2], %s217
        %s219 = smul.u32 2, %s19
        %p220 = scmp.lt.s32.totalorder %s219, 3
        %s221 = scalar_select %p220, %s219, 3
        %s222 = smul.addr %s221, 8
        %s223 = scalar_lea.vmem %s0, %s222
        %s224 = smul.u32 2, %s19
        %s225 = smul.u32 2, %s19
        %v227 = vld [vmem:[%s223] sm:$0xff]
        %v228 = vld [vmem:[%s223 + $0x8] sm:$0xff]
        %v229 = vpack.c.bf16 %v228, %v227
        %v230 = vld [vmem:[%s1] sm:$0xf]
        %v231 = vld [vmem:[%s1 + $0x4] sm:$0xf]
        %v234 = vunpack.c.l.b16 %v230
        %v235 = vunpack.c.l.b16 %v231
        %v236 = vpack.c.b16 %v235, %v234
        %vm237 = vcmask 130048
        %v239 = vsel %vm237, %v236, 0
        %241 = vmatprep.subr.bf16.mxu0 0
        %242 = vmatpush1.bf16.msra.mxu0 %v229
        %243 = vmatprep.subr.bf16.mxu0 0
        %244 = vmatpush1.bf16.msra.mxu0 0
        %245 = vmatprep.subr.bf16.mxu0 0
        %246 = vmatpush1.bf16.msra.mxu0 0
        %247 = vmatprep.subr.bf16.mxu0 0
        %248 = vmatpush1.bf16.msra.mxu0 0
        %249 = vmatprep.subr.bf16.mxu0 0
        %250 = vmatpush1.bf16.msra.mxu0 0
        %251 = vmatprep.subr.bf16.mxu0 0
        %252 = vmatpush1.bf16.msra.mxu0 0
        %253 = vmatprep.subr.bf16.mxu0 0
        %254 = vmatpush1.bf16.msra.mxu0 0
        %255 = vmatprep.subr.bf16.mxu0 0
        %256 = vmatpush1.bf16.msra.mxu0 0
        %257 = vmatprep.subr.bf16.mxu0 0
        %258 = vmatpush1.bf16.msra.mxu0 0
        %259 = vmatprep.subr.bf16.mxu0 0
        %260 = vmatpush1.bf16.msra.mxu0 0
        %261 = vmatprep.subr.bf16.mxu0 0
        %262 = vmatpush1.bf16.msra.mxu0 0
        %263 = vmatprep.subr.bf16.mxu0 0
        %264 = vmatpush1.bf16.msra.mxu0 0
        %265 = vmatprep.subr.bf16.mxu0 0
        %266 = vmatpush1.bf16.msra.mxu0 0
        %267 = vmatprep.subr.bf16.mxu0 0
        %268 = vmatpush1.bf16.msra.mxu0 0
        %269 = vmatprep.subr.bf16.mxu0 0
        %270 = vmatpush1.bf16.msra.mxu0 0
        %271 = vmatprep.subr.bf16.mxu0 0
        %272 = vmatpush1.bf16.msra.mxu0 0
        %273 = vmatprep.mubr.bf16.mxu0 0
        %274 = vmatmul.mubr.bf16.gmra.mrb[0].mxu0 %v239
        %v275 = vpop.f32.mrb[0].mxu0
        %v276 = vadd.f32 0.0, %v275
        %v277 = vpop.f32.mrb[0].mxu0
        %v278 = vpop.f32.mrb[0].mxu0
        %v279 = vadd.f32 0.0, %v278
        %v280 = vpop.f32.mrb[0].mxu0
        %281 = vdwg.mxu0
        %v282 = vpack.c.bf16 %v279, %v276
        %s283 = scalar_lea.vmem %s1, 8
        %v284 = vld [vmem:[%s283] sm:$0xf]
        %v285 = vld [vmem:[%s283 + $0x4] sm:$0xf]
        %v288 = vunpack.c.l.b16 %v284
        %v289 = vunpack.c.l.b16 %v285
        %v290 = vpack.c.b16 %v289, %v288
        %v292 = vsel %vm237, %v290, 0
        %294 = vmatprep.subr.bf16.mxu0 0
        %295 = vmatpush1.bf16.msra.mxu0 %v229
        %296 = vmatprep.subr.bf16.mxu0 0
        %297 = vmatpush1.bf16.msra.mxu0 0
        %298 = vmatprep.subr.bf16.mxu0 0
        %299 = vmatpush1.bf16.msra.mxu0 0
        %300 = vmatprep.subr.bf16.mxu0 0
        %301 = vmatpush1.bf16.msra.mxu0 0
        %302 = vmatprep.subr.bf16.mxu0 0
        %303 = vmatpush1.bf16.msra.mxu0 0
        %304 = vmatprep.subr.bf16.mxu0 0
        %305 = vmatpush1.bf16.msra.mxu0 0
        %306 = vmatprep.subr.bf16.mxu0 0
        %307 = vmatpush1.bf16.msra.mxu0 0
        %308 = vmatprep.subr.bf16.mxu0 0
        %309 = vmatpush1.bf16.msra.mxu0 0
        %310 = vmatprep.subr.bf16.mxu0 0
        %311 = vmatpush1.bf16.msra.mxu0 0
        %312 = vmatprep.subr.bf16.mxu0 0
        %313 = vmatpush1.bf16.msra.mxu0 0
        %314 = vmatprep.subr.bf16.mxu0 0
        %315 = vmatpush1.bf16.msra.mxu0 0
        %316 = vmatprep.subr.bf16.mxu0 0
        %317 = vmatpush1.bf16.msra.mxu0 0
        %318 = vmatprep.subr.bf16.mxu0 0
        %319 = vmatpush1.bf16.msra.mxu0 0
        %320 = vmatprep.subr.bf16.mxu0 0
        %321 = vmatpush1.bf16.msra.mxu0 0
        %322 = vmatprep.subr.bf16.mxu0 0
        %323 = vmatpush1.bf16.msra.mxu0 0
        %324 = vmatprep.subr.bf16.mxu0 0
        %325 = vmatpush1.bf16.msra.mxu0 0
        %326 = vmatprep.mubr.bf16.mxu0 0
        %327 = vmatmul.mubr.bf16.gmra.mrb[0].mxu0 %v292
        %v328 = vpop.f32.mrb[0].mxu0
        %v329 = vadd.f32 0.0, %v328
        %v330 = vpop.f32.mrb[0].mxu0
        %v331 = vpop.f32.mrb[0].mxu0
        %v332 = vadd.f32 0.0, %v331
        %v333 = vpop.f32.mrb[0].mxu0
        %334 = vdwg.mxu0
        %v335 = vpack.c.bf16 %v332, %v329
        %337 = vrot.lane.b32.xlu0 %v282, 36
        %v338 = vpop.permute.xlu0 %337
        %340 = vrot.lane.b32.xlu0 %v335, 72
        %v341 = vpop.permute.xlu0 %340
        %vm342 = vcmask 293888
        %v345 = vsel %vm342, %v229, %v338
        %vm346 = vcmask 588800
        %v348 = vsel %vm346, %v345, %v341
        %v349 = vld [vmem:[%s2] sm:$0xff]
        %v350 = vld [vmem:[%s2 + $0x8] sm:$0xff]
        %v351 = vld [vmem:[%s4] sm:$0xff]
        %v352 = vld [vmem:[%s4 + $0x8] sm:$0xff]
        %v353 = vld [vmem:[%s3] sm:$0xf]
        %v354 = vld [vmem:[%s3 + $0x4] sm:$0xf]
        %v355 = vld [vmem:[%s3 + $0x8] sm:$0xf]
        %v356 = vld [vmem:[%s3 + $0xc] sm:$0xf]
        %v357 = vld [vmem:[%s3 + $0x10] sm:$0xf]
        %v358 = vld [vmem:[%s3 + $0x14] sm:$0xf]
        %v359 = vld [vmem:[%s3 + $0x18] sm:$0xf]
        %v360 = vld [vmem:[%s3 + $0x1c] sm:$0xf]
        %v361 = vld [vmem:[%s3 + $0x20] sm:$0xf]
        %v362 = vld [vmem:[%s3 + $0x24] sm:$0xf]
        %v363 = vld [vmem:[%s3 + $0x28] sm:$0xf]
        %v364 = vld [vmem:[%s3 + $0x2c] sm:$0xf]
        %v365 = vld [vmem:[%s3 + $0x30] sm:$0xf]
        %v366 = vld [vmem:[%s3 + $0x34] sm:$0x3]
        %v381 = vunpack.c.l.b16 %v353
        %v382 = vunpack.c.l.b16 %v354
        %v383 = vunpack.c.l.b16 %v355
        %v384 = vunpack.c.l.b16 %v356
        %v385 = vunpack.c.l.b16 %v357
        %v386 = vunpack.c.l.b16 %v358
        %v387 = vunpack.c.l.b16 %v359
        %v388 = vunpack.c.l.b16 %v360
        %v389 = vunpack.c.l.b16 %v361
        %v390 = vunpack.c.l.b16 %v362
        %v391 = vunpack.c.l.b16 %v363
        %v392 = vunpack.c.l.b16 %v364
        %v393 = vunpack.c.l.b16 %v365
        %v394 = vunpack.c.l.b16 %v366
        %v395 = vpack.c.b16 %v382, %v381
        %v396 = vpack.c.b16 %v384, %v383
        %v397 = vpack.c.b16 %v386, %v385
        %v398 = vpack.c.b16 %v388, %v387
        %v399 = vpack.c.b16 %v390, %v389
        %v400 = vpack.c.b16 %v392, %v391
        %v401 = vpack.c.b16 %v394, %v393
        %vm408 = vcmask 883712
        %v409 = vsel %vm408, %v348, 0
        %vm411 = vcmask 1045504
        %v413 = vsel %vm411, %v401, 0
        %415 = vmatprep.subr.bf16.mxu0 0
        %416 = vmatpush1.bf16.msra.mxu0 %v395
        %417 = vmatprep.subr.bf16.mxu0 0
        %418 = vmatpush1.bf16.msra.mxu0 %v396
        %419 = vmatprep.subr.bf16.mxu0 0
        %420 = vmatpush1.bf16.msra.mxu0 %v397
        %421 = vmatprep.subr.bf16.mxu0 0
        %422 = vmatpush1.bf16.msra.mxu0 %v398
        %423 = vmatprep.subr.bf16.mxu0 0
        %424 = vmatpush1.bf16.msra.mxu0 %v399
        %425 = vmatprep.subr.bf16.mxu0 0
        %426 = vmatpush1.bf16.msra.mxu0 %v400
        %427 = vmatprep.subr.bf16.mxu0 0
        %428 = vmatpush1.bf16.msra.mxu0 %v413
        %429 = vmatprep.subr.bf16.mxu0 0
        %430 = vmatpush1.bf16.msra.mxu0 0
        %431 = vmatprep.subr.bf16.mxu0 0
        %432 = vmatpush1.bf16.msra.mxu0 0
        %433 = vmatprep.subr.bf16.mxu0 0
        %434 = vmatpush1.bf16.msra.mxu0 0
        %435 = vmatprep.subr.bf16.mxu0 0
        %436 = vmatpush1.bf16.msra.mxu0 0
        %437 = vmatprep.subr.bf16.mxu0 0
        %438 = vmatpush1.bf16.msra.mxu0 0
        %439 = vmatprep.subr.bf16.mxu0 0
        %440 = vmatpush1.bf16.msra.mxu0 0
        %441 = vmatprep.subr.bf16.mxu0 0
        %442 = vmatpush1.bf16.msra.mxu0 0
        %443 = vmatprep.subr.bf16.mxu0 0
        %444 = vmatpush1.bf16.msra.mxu0 0
        %445 = vmatprep.subr.bf16.mxu0 0
        %446 = vmatpush1.bf16.msra.mxu0 0
        %447 = vmatprep.mubr.bf16.mxu0 0
        %448 = vmatmul.mubr.bf16.gmra.mrb[0].mxu0 %v409
        %v449 = vpop.f32.mrb[0].mxu0
        %v450 = vadd.f32 0.0, %v449
        %v451 = vpop.f32.mrb[0].mxu0
        %v452 = vpop.f32.mrb[0].mxu0
        %v453 = vadd.f32 0.0, %v452
        %v454 = vpop.f32.mrb[0].mxu0
        %455 = vdwg.mxu0
        %457 = vset.pattern.permute.xlu0 0
        %458 = vperm.xlu0 %457, %v349
        %v459 = vpop.permute.xlu0 %458
        %462 = vset.pattern.permute.xlu0 0
        %463 = vperm.xlu0 %462, %v350
        %v464 = vpop.permute.xlu0 %463
        %v466 = vmul.f32 %v459, %v450
        %v467 = vmul.f32 %v464, %v453
        %v468 = vadd.f32 %v351, %v466
        %v469 = vadd.f32 %v352, %v467
        %s470 = scalar_lea.vmem %s3, 56
        %v471 = vld [vmem:[%s470] sm:$0xf]
        %v472 = vld [vmem:[%s470 + $0x4] sm:$0xf]
        %v473 = vld [vmem:[%s470 + $0x8] sm:$0xf]
        %v474 = vld [vmem:[%s470 + $0xc] sm:$0xf]
        %v475 = vld [vmem:[%s470 + $0x10] sm:$0xf]
        %v476 = vld [vmem:[%s470 + $0x14] sm:$0xf]
        %v477 = vld [vmem:[%s470 + $0x18] sm:$0xf]
        %v478 = vld [vmem:[%s470 + $0x1c] sm:$0xf]
        %v479 = vld [vmem:[%s470 + $0x20] sm:$0xf]
        %v480 = vld [vmem:[%s470 + $0x24] sm:$0xf]
        %v481 = vld [vmem:[%s470 + $0x28] sm:$0xf]
        %v482 = vld [vmem:[%s470 + $0x2c] sm:$0xf]
        %v483 = vld [vmem:[%s470 + $0x30] sm:$0xf]
        %v484 = vld [vmem:[%s470 + $0x34] sm:$0x3]
        %v499 = vunpack.c.l.b16 %v471
        %v500 = vunpack.c.l.b16 %v472
        %v501 = vunpack.c.l.b16 %v473
        %v502 = vunpack.c.l.b16 %v474
        %v503 = vunpack.c.l.b16 %v475
        %v504 = vunpack.c.l.b16 %v476
        %v505 = vunpack.c.l.b16 %v477
        %v506 = vunpack.c.l.b16 %v478
        %v507 = vunpack.c.l.b16 %v479
        %v508 = vunpack.c.l.b16 %v480
        %v509 = vunpack.c.l.b16 %v481
        %v510 = vunpack.c.l.b16 %v482
        %v511 = vunpack.c.l.b16 %v483
        %v512 = vunpack.c.l.b16 %v484
        %v513 = vpack.c.b16 %v500, %v499
        %v514 = vpack.c.b16 %v502, %v501
        %v515 = vpack.c.b16 %v504, %v503
        %v516 = vpack.c.b16 %v506, %v505
        %v517 = vpack.c.b16 %v508, %v507
        %v518 = vpack.c.b16 %v510, %v509
        %v519 = vpack.c.b16 %v512, %v511
        %v527 = vsel %vm411, %v519, 0
        %529 = vmatprep.subr.bf16.mxu0 0
        %530 = vmatpush1.bf16.msra.mxu0 %v513
        %531 = vmatprep.subr.bf16.mxu0 0
        %532 = vmatpush1.bf16.msra.mxu0 %v514
        %533 = vmatprep.subr.bf16.mxu0 0
        %534 = vmatpush1.bf16.msra.mxu0 %v515
        %535 = vmatprep.subr.bf16.mxu0 0
        %536 = vmatpush1.bf16.msra.mxu0 %v516
        %537 = vmatprep.subr.bf16.mxu0 0
        %538 = vmatpush1.bf16.msra.mxu0 %v517
        %539 = vmatprep.subr.bf16.mxu0 0
        %540 = vmatpush1.bf16.msra.mxu0 %v518
        %541 = vmatprep.subr.bf16.mxu0 0
        %542 = vmatpush1.bf16.msra.mxu0 %v527
        %543 = vmatprep.subr.bf16.mxu0 0
        %544 = vmatpush1.bf16.msra.mxu0 0
        %545 = vmatprep.subr.bf16.mxu0 0
        %546 = vmatpush1.bf16.msra.mxu0 0
        %547 = vmatprep.subr.bf16.mxu0 0
        %548 = vmatpush1.bf16.msra.mxu0 0
        %549 = vmatprep.subr.bf16.mxu0 0
        %550 = vmatpush1.bf16.msra.mxu0 0
        %551 = vmatprep.subr.bf16.mxu0 0
        %552 = vmatpush1.bf16.msra.mxu0 0
        %553 = vmatprep.subr.bf16.mxu0 0
        %554 = vmatpush1.bf16.msra.mxu0 0
        %555 = vmatprep.subr.bf16.mxu0 0
        %556 = vmatpush1.bf16.msra.mxu0 0
        %557 = vmatprep.subr.bf16.mxu0 0
        %558 = vmatpush1.bf16.msra.mxu0 0
        %559 = vmatprep.subr.bf16.mxu0 0
        %560 = vmatpush1.bf16.msra.mxu0 0
        %561 = vmatprep.mubr.bf16.mxu0 0
        %562 = vmatmul.mubr.bf16.gmra.mrb[0].mxu0 %v409
        %v563 = vpop.f32.mrb[0].mxu0
        %v564 = vadd.f32 0.0, %v563
        %v565 = vpop.f32.mrb[0].mxu0
        %v566 = vpop.f32.mrb[0].mxu0
        %v567 = vadd.f32 0.0, %v566
        %v568 = vpop.f32.mrb[0].mxu0
        %569 = vdwg.mxu0
        %570 = vset.pattern.permute.xlu0 1
        %571 = vperm.xlu0 %570, %v349
        %v572 = vpop.permute.xlu0 %571
        %574 = vset.pattern.permute.xlu0 1
        %575 = vperm.xlu0 %574, %v350
        %v576 = vpop.permute.xlu0 %575
        %v578 = vmul.f32 %v572, %v564
        %v579 = vmul.f32 %v576, %v567
        %v580 = vadd.f32 %v468, %v578
        %v581 = vadd.f32 %v469, %v579
        %s582 = scalar_lea.vmem %s3, 112
        %v583 = vld [vmem:[%s582] sm:$0xf]
        %v584 = vld [vmem:[%s582 + $0x4] sm:$0xf]
        %v585 = vld [vmem:[%s582 + $0x8] sm:$0xf]
        %v586 = vld [vmem:[%s582 + $0xc] sm:$0xf]
        %v587 = vld [vmem:[%s582 + $0x10] sm:$0xf]
        %v588 = vld [vmem:[%s582 + $0x14] sm:$0xf]
        %v589 = vld [vmem:[%s582 + $0x18] sm:$0xf]
        %v590 = vld [vmem:[%s582 + $0x1c] sm:$0xf]
        %v591 = vld [vmem:[%s582 + $0x20] sm:$0xf]
        %v592 = vld [vmem:[%s582 + $0x24] sm:$0xf]
        %v593 = vld [vmem:[%s582 + $0x28] sm:$0xf]
        %v594 = vld [vmem:[%s582 + $0x2c] sm:$0xf]
        %v595 = vld [vmem:[%s582 + $0x30] sm:$0xf]
        %v596 = vld [vmem:[%s582 + $0x34] sm:$0x3]
        %v611 = vunpack.c.l.b16 %v583
        %v612 = vunpack.c.l.b16 %v584
        %v613 = vunpack.c.l.b16 %v585
        %v614 = vunpack.c.l.b16 %v586
        %v615 = vunpack.c.l.b16 %v587
        %v616 = vunpack.c.l.b16 %v588
        %v617 = vunpack.c.l.b16 %v589
        %v618 = vunpack.c.l.b16 %v590
        %v619 = vunpack.c.l.b16 %v591
        %v620 = vunpack.c.l.b16 %v592
        %v621 = vunpack.c.l.b16 %v593
        %v622 = vunpack.c.l.b16 %v594
        %v623 = vunpack.c.l.b16 %v595
        %v624 = vunpack.c.l.b16 %v596
        %v625 = vpack.c.b16 %v612, %v611
        %v626 = vpack.c.b16 %v614, %v613
        %v627 = vpack.c.b16 %v616, %v615
        %v628 = vpack.c.b16 %v618, %v617
        %v629 = vpack.c.b16 %v620, %v619
        %v630 = vpack.c.b16 %v622, %v621
        %v631 = vpack.c.b16 %v624, %v623
        %v639 = vsel %vm411, %v631, 0
        %641 = vmatprep.subr.bf16.mxu0 0
        %642 = vmatpush1.bf16.msra.mxu0 %v625
        %643 = vmatprep.subr.bf16.mxu0 0
        %644 = vmatpush1.bf16.msra.mxu0 %v626
        %645 = vmatprep.subr.bf16.mxu0 0
        %646 = vmatpush1.bf16.msra.mxu0 %v627
        %647 = vmatprep.subr.bf16.mxu0 0
        %648 = vmatpush1.bf16.msra.mxu0 %v628
        %649 = vmatprep.subr.bf16.mxu0 0
        %650 = vmatpush1.bf16.msra.mxu0 %v629
        %651 = vmatprep.subr.bf16.mxu0 0
        %652 = vmatpush1.bf16.msra.mxu0 %v630
        %653 = vmatprep.subr.bf16.mxu0 0
        %654 = vmatpush1.bf16.msra.mxu0 %v639
        %655 = vmatprep.subr.bf16.mxu0 0
        %656 = vmatpush1.bf16.msra.mxu0 0
        %657 = vmatprep.subr.bf16.mxu0 0
        %658 = vmatpush1.bf16.msra.mxu0 0
        %659 = vmatprep.subr.bf16.mxu0 0
        %660 = vmatpush1.bf16.msra.mxu0 0
        %661 = vmatprep.subr.bf16.mxu0 0
        %662 = vmatpush1.bf16.msra.mxu0 0
        %663 = vmatprep.subr.bf16.mxu0 0
        %664 = vmatpush1.bf16.msra.mxu0 0
        %665 = vmatprep.subr.bf16.mxu0 0
        %666 = vmatpush1.bf16.msra.mxu0 0
        %667 = vmatprep.subr.bf16.mxu0 0
        %668 = vmatpush1.bf16.msra.mxu0 0
        %669 = vmatprep.subr.bf16.mxu0 0
        %670 = vmatpush1.bf16.msra.mxu0 0
        %671 = vmatprep.subr.bf16.mxu0 0
        %672 = vmatpush1.bf16.msra.mxu0 0
        %673 = vmatprep.mubr.bf16.mxu0 0
        %674 = vmatmul.mubr.bf16.gmra.mrb[0].mxu0 %v409
        %v675 = vpop.f32.mrb[0].mxu0
        %v676 = vadd.f32 0.0, %v675
        %v677 = vpop.f32.mrb[0].mxu0
        %v678 = vpop.f32.mrb[0].mxu0
        %v679 = vadd.f32 0.0, %v678
        %v680 = vpop.f32.mrb[0].mxu0
        %681 = vdwg.mxu0
        %682 = vset.pattern.permute.xlu0 2
        %683 = vperm.xlu0 %682, %v349
        %v684 = vpop.permute.xlu0 %683
        %686 = vset.pattern.permute.xlu0 2
        %687 = vperm.xlu0 %686, %v350
        %v688 = vpop.permute.xlu0 %687
        %v690 = vmul.f32 %v684, %v676
        %v691 = vmul.f32 %v688, %v679
        %v692 = vadd.f32 %v580, %v690
        %v693 = vadd.f32 %v581, %v691
        %s694 = scalar_lea.vmem %s3, 168
        %v695 = vld [vmem:[%s694] sm:$0xf]
        %v696 = vld [vmem:[%s694 + $0x4] sm:$0xf]
        %v697 = vld [vmem:[%s694 + $0x8] sm:$0xf]
        %v698 = vld [vmem:[%s694 + $0xc] sm:$0xf]
        %v699 = vld [vmem:[%s694 + $0x10] sm:$0xf]
        %v700 = vld [vmem:[%s694 + $0x14] sm:$0xf]
        %v701 = vld [vmem:[%s694 + $0x18] sm:$0xf]
        %v702 = vld [vmem:[%s694 + $0x1c] sm:$0xf]
        %v703 = vld [vmem:[%s694 + $0x20] sm:$0xf]
        %v704 = vld [vmem:[%s694 + $0x24] sm:$0xf]
        %v705 = vld [vmem:[%s694 + $0x28] sm:$0xf]
        %v706 = vld [vmem:[%s694 + $0x2c] sm:$0xf]
        %v707 = vld [vmem:[%s694 + $0x30] sm:$0xf]
        %v708 = vld [vmem:[%s694 + $0x34] sm:$0x3]
        %v723 = vunpack.c.l.b16 %v695
        %v724 = vunpack.c.l.b16 %v696
        %v725 = vunpack.c.l.b16 %v697
        %v726 = vunpack.c.l.b16 %v698
        %v727 = vunpack.c.l.b16 %v699
        %v728 = vunpack.c.l.b16 %v700
        %v729 = vunpack.c.l.b16 %v701
        %v730 = vunpack.c.l.b16 %v702
        %v731 = vunpack.c.l.b16 %v703
        %v732 = vunpack.c.l.b16 %v704
        %v733 = vunpack.c.l.b16 %v705
        %v734 = vunpack.c.l.b16 %v706
        %v735 = vunpack.c.l.b16 %v707
        %v736 = vunpack.c.l.b16 %v708
        %v737 = vpack.c.b16 %v724, %v723
        %v738 = vpack.c.b16 %v726, %v725
        %v739 = vpack.c.b16 %v728, %v727
        %v740 = vpack.c.b16 %v730, %v729
        %v741 = vpack.c.b16 %v732, %v731
        %v742 = vpack.c.b16 %v734, %v733
        %v743 = vpack.c.b16 %v736, %v735
        %v751 = vsel %vm411, %v743, 0
        %753 = vmatprep.subr.bf16.mxu0 0
        %754 = vmatpush1.bf16.msra.mxu0 %v737
        %755 = vmatprep.subr.bf16.mxu0 0
        %756 = vmatpush1.bf16.msra.mxu0 %v738
        %757 = vmatprep.subr.bf16.mxu0 0
        %758 = vmatpush1.bf16.msra.mxu0 %v739
        %759 = vmatprep.subr.bf16.mxu0 0
        %760 = vmatpush1.bf16.msra.mxu0 %v740
        %761 = vmatprep.subr.bf16.mxu0 0
        %762 = vmatpush1.bf16.msra.mxu0 %v741
        %763 = vmatprep.subr.bf16.mxu0 0
        %764 = vmatpush1.bf16.msra.mxu0 %v742
        %765 = vmatprep.subr.bf16.mxu0 0
        %766 = vmatpush1.bf16.msra.mxu0 %v751
        %767 = vmatprep.subr.bf16.mxu0 0
        %768 = vmatpush1.bf16.msra.mxu0 0
        %769 = vmatprep.subr.bf16.mxu0 0
        %770 = vmatpush1.bf16.msra.mxu0 0
        %771 = vmatprep.subr.bf16.mxu0 0
        %772 = vmatpush1.bf16.msra.mxu0 0
        %773 = vmatprep.subr.bf16.mxu0 0
        %774 = vmatpush1.bf16.msra.mxu0 0
        %775 = vmatprep.subr.bf16.mxu0 0
        %776 = vmatpush1.bf16.msra.mxu0 0
        %777 = vmatprep.subr.bf16.mxu0 0
        %778 = vmatpush1.bf16.msra.mxu0 0
        %779 = vmatprep.subr.bf16.mxu0 0
        %780 = vmatpush1.bf16.msra.mxu0 0
        %781 = vmatprep.subr.bf16.mxu0 0
        %782 = vmatpush1.bf16.msra.mxu0 0
        %783 = vmatprep.subr.bf16.mxu0 0
        %784 = vmatpush1.bf16.msra.mxu0 0
        %785 = vmatprep.mubr.bf16.mxu0 0
        %786 = vmatmul.mubr.bf16.gmra.mrb[0].mxu0 %v409
        %v787 = vpop.f32.mrb[0].mxu0
        %v788 = vadd.f32 0.0, %v787
        %v789 = vpop.f32.mrb[0].mxu0
        %v790 = vpop.f32.mrb[0].mxu0
        %v791 = vadd.f32 0.0, %v790
        %v792 = vpop.f32.mrb[0].mxu0
        %793 = vdwg.mxu0
        %794 = vset.pattern.permute.xlu0 3
        %795 = vperm.xlu0 %794, %v349
        %v796 = vpop.permute.xlu0 %795
        %798 = vset.pattern.permute.xlu0 3
        %799 = vperm.xlu0 %798, %v350
        %v800 = vpop.permute.xlu0 %799
        %v802 = vmul.f32 %v796, %v788
        %v803 = vmul.f32 %v800, %v791
        %v804 = vadd.f32 %v692, %v802
        %v805 = vadd.f32 %v693, %v803
        %s806 = scalar_lea.vmem %s3, 224
        %v807 = vld [vmem:[%s806] sm:$0xf]
        %v808 = vld [vmem:[%s806 + $0x4] sm:$0xf]
        %v809 = vld [vmem:[%s806 + $0x8] sm:$0xf]
        %v810 = vld [vmem:[%s806 + $0xc] sm:$0xf]
        %v811 = vld [vmem:[%s806 + $0x10] sm:$0xf]
        %v812 = vld [vmem:[%s806 + $0x14] sm:$0xf]
        %v813 = vld [vmem:[%s806 + $0x18] sm:$0xf]
        %v814 = vld [vmem:[%s806 + $0x1c] sm:$0xf]
        %v815 = vld [vmem:[%s806 + $0x20] sm:$0xf]
        %v816 = vld [vmem:[%s806 + $0x24] sm:$0xf]
        %v817 = vld [vmem:[%s806 + $0x28] sm:$0xf]
        %v818 = vld [vmem:[%s806 + $0x2c] sm:$0xf]
        %v819 = vld [vmem:[%s806 + $0x30] sm:$0xf]
        %v820 = vld [vmem:[%s806 + $0x34] sm:$0x3]
        %v835 = vunpack.c.l.b16 %v807
        %v836 = vunpack.c.l.b16 %v808
        %v837 = vunpack.c.l.b16 %v809
        %v838 = vunpack.c.l.b16 %v810
        %v839 = vunpack.c.l.b16 %v811
        %v840 = vunpack.c.l.b16 %v812
        %v841 = vunpack.c.l.b16 %v813
        %v842 = vunpack.c.l.b16 %v814
        %v843 = vunpack.c.l.b16 %v815
        %v844 = vunpack.c.l.b16 %v816
        %v845 = vunpack.c.l.b16 %v817
        %v846 = vunpack.c.l.b16 %v818
        %v847 = vunpack.c.l.b16 %v819
        %v848 = vunpack.c.l.b16 %v820
        %v849 = vpack.c.b16 %v836, %v835
        %v850 = vpack.c.b16 %v838, %v837
        %v851 = vpack.c.b16 %v840, %v839
        %v852 = vpack.c.b16 %v842, %v841
        %v853 = vpack.c.b16 %v844, %v843
        %v854 = vpack.c.b16 %v846, %v845
        %v855 = vpack.c.b16 %v848, %v847
        %v863 = vsel %vm411, %v855, 0
        %865 = vmatprep.subr.bf16.mxu0 0
        %866 = vmatpush1.bf16.msra.mxu0 %v849
        %867 = vmatprep.subr.bf16.mxu0 0
        %868 = vmatpush1.bf16.msra.mxu0 %v850
        %869 = vmatprep.subr.bf16.mxu0 0
        %870 = vmatpush1.bf16.msra.mxu0 %v851
        %871 = vmatprep.subr.bf16.mxu0 0
        %872 = vmatpush1.bf16.msra.mxu0 %v852
        %873 = vmatprep.subr.bf16.mxu0 0
        %874 = vmatpush1.bf16.msra.mxu0 %v853
        %875 = vmatprep.subr.bf16.mxu0 0
        %876 = vmatpush1.bf16.msra.mxu0 %v854
        %877 = vmatprep.subr.bf16.mxu0 0
        %878 = vmatpush1.bf16.msra.mxu0 %v863
        %879 = vmatprep.subr.bf16.mxu0 0
        %880 = vmatpush1.bf16.msra.mxu0 0
        %881 = vmatprep.subr.bf16.mxu0 0
        %882 = vmatpush1.bf16.msra.mxu0 0
        %883 = vmatprep.subr.bf16.mxu0 0
        %884 = vmatpush1.bf16.msra.mxu0 0
        %885 = vmatprep.subr.bf16.mxu0 0
        %886 = vmatpush1.bf16.msra.mxu0 0
        %887 = vmatprep.subr.bf16.mxu0 0
        %888 = vmatpush1.bf16.msra.mxu0 0
        %889 = vmatprep.subr.bf16.mxu0 0
        %890 = vmatpush1.bf16.msra.mxu0 0
        %891 = vmatprep.subr.bf16.mxu0 0
        %892 = vmatpush1.bf16.msra.mxu0 0
        %893 = vmatprep.subr.bf16.mxu0 0
        %894 = vmatpush1.bf16.msra.mxu0 0
        %895 = vmatprep.subr.bf16.mxu0 0
        %896 = vmatpush1.bf16.msra.mxu0 0
        %897 = vmatprep.mubr.bf16.mxu0 0
        %898 = vmatmul.mubr.bf16.gmra.mrb[0].mxu0 %v409
        %v899 = vpop.f32.mrb[0].mxu0
        %v900 = vadd.f32 0.0, %v899
        %v901 = vpop.f32.mrb[0].mxu0
        %v902 = vpop.f32.mrb[0].mxu0
        %v903 = vadd.f32 0.0, %v902
        %v904 = vpop.f32.mrb[0].mxu0
        %905 = vdwg.mxu0
        %906 = vset.pattern.permute.xlu0 4
        %907 = vperm.xlu0 %906, %v349
        %v908 = vpop.permute.xlu0 %907
        %910 = vset.pattern.permute.xlu0 4
        %911 = vperm.xlu0 %910, %v350
        %v912 = vpop.permute.xlu0 %911
        %v914 = vmul.f32 %v908, %v900
        %v915 = vmul.f32 %v912, %v903
        %v916 = vadd.f32 %v804, %v914
        %v917 = vadd.f32 %v805, %v915
        %s918 = scalar_lea.vmem %s3, 280
        %v919 = vld [vmem:[%s918] sm:$0xf]
        %v920 = vld [vmem:[%s918 + $0x4] sm:$0xf]
        %v921 = vld [vmem:[%s918 + $0x8] sm:$0xf]
        %v922 = vld [vmem:[%s918 + $0xc] sm:$0xf]
        %v923 = vld [vmem:[%s918 + $0x10] sm:$0xf]
        %v924 = vld [vmem:[%s918 + $0x14] sm:$0xf]
        %v925 = vld [vmem:[%s918 + $0x18] sm:$0xf]
        %v926 = vld [vmem:[%s918 + $0x1c] sm:$0xf]
        %v927 = vld [vmem:[%s918 + $0x20] sm:$0xf]
        %v928 = vld [vmem:[%s918 + $0x24] sm:$0xf]
        %v929 = vld [vmem:[%s918 + $0x28] sm:$0xf]
        %v930 = vld [vmem:[%s918 + $0x2c] sm:$0xf]
        %v931 = vld [vmem:[%s918 + $0x30] sm:$0xf]
        %v932 = vld [vmem:[%s918 + $0x34] sm:$0x3]
        %v947 = vunpack.c.l.b16 %v919
        %v948 = vunpack.c.l.b16 %v920
        %v949 = vunpack.c.l.b16 %v921
        %v950 = vunpack.c.l.b16 %v922
        %v951 = vunpack.c.l.b16 %v923
        %v952 = vunpack.c.l.b16 %v924
        %v953 = vunpack.c.l.b16 %v925
        %v954 = vunpack.c.l.b16 %v926
        %v955 = vunpack.c.l.b16 %v927
        %v956 = vunpack.c.l.b16 %v928
        %v957 = vunpack.c.l.b16 %v929
        %v958 = vunpack.c.l.b16 %v930
        %v959 = vunpack.c.l.b16 %v931
        %v960 = vunpack.c.l.b16 %v932
        %v961 = vpack.c.b16 %v948, %v947
        %v962 = vpack.c.b16 %v950, %v949
        %v963 = vpack.c.b16 %v952, %v951
        %v964 = vpack.c.b16 %v954, %v953
        %v965 = vpack.c.b16 %v956, %v955
        %v966 = vpack.c.b16 %v958, %v957
        %v967 = vpack.c.b16 %v960, %v959
        %v975 = vsel %vm411, %v967, 0
        %977 = vmatprep.subr.bf16.mxu0 0
        %978 = vmatpush1.bf16.msra.mxu0 %v961
        %979 = vmatprep.subr.bf16.mxu0 0
        %980 = vmatpush1.bf16.msra.mxu0 %v962
        %981 = vmatprep.subr.bf16.mxu0 0
        %982 = vmatpush1.bf16.msra.mxu0 %v963
        %983 = vmatprep.subr.bf16.mxu0 0
        %984 = vmatpush1.bf16.msra.mxu0 %v964
        %985 = vmatprep.subr.bf16.mxu0 0
        %986 = vmatpush1.bf16.msra.mxu0 %v965
        %987 = vmatprep.subr.bf16.mxu0 0
        %988 = vmatpush1.bf16.msra.mxu0 %v966
        %989 = vmatprep.subr.bf16.mxu0 0
        %990 = vmatpush1.bf16.msra.mxu0 %v975
        %991 = vmatprep.subr.bf16.mxu0 0
        %992 = vmatpush1.bf16.msra.mxu0 0
        %993 = vmatprep.subr.bf16.mxu0 0
        %994 = vmatpush1.bf16.msra.mxu0 0
        %995 = vmatprep.subr.bf16.mxu0 0
        %996 = vmatpush1.bf16.msra.mxu0 0
        %997 = vmatprep.subr.bf16.mxu0 0
        %998 = vmatpush1.bf16.msra.mxu0 0
        %999 = vmatprep.subr.bf16.mxu0 0
        %1000 = vmatpush1.bf16.msra.mxu0 0
        %1001 = vmatprep.subr.bf16.mxu0 0
        %1002 = vmatpush1.bf16.msra.mxu0 0
        %1003 = vmatprep.subr.bf16.mxu0 0
        %1004 = vmatpush1.bf16.msra.mxu0 0
        %1005 = vmatprep.subr.bf16.mxu0 0
        %1006 = vmatpush1.bf16.msra.mxu0 0
        %1007 = vmatprep.subr.bf16.mxu0 0
        %1008 = vmatpush1.bf16.msra.mxu0 0
        %1009 = vmatprep.mubr.bf16.mxu0 0
        %1010 = vmatmul.mubr.bf16.gmra.mrb[0].mxu0 %v409
        %v1011 = vpop.f32.mrb[0].mxu0
        %v1012 = vadd.f32 0.0, %v1011
        %v1013 = vpop.f32.mrb[0].mxu0
        %v1014 = vpop.f32.mrb[0].mxu0
        %v1015 = vadd.f32 0.0, %v1014
        %v1016 = vpop.f32.mrb[0].mxu0
        %1017 = vdwg.mxu0
        %1018 = vset.pattern.permute.xlu0 5
        %1019 = vperm.xlu0 %1018, %v349
        %v1020 = vpop.permute.xlu0 %1019
        %1022 = vset.pattern.permute.xlu0 5
        %1023 = vperm.xlu0 %1022, %v350
        %v1024 = vpop.permute.xlu0 %1023
        %v1026 = vmul.f32 %v1020, %v1012
        %v1027 = vmul.f32 %v1024, %v1015
        %v1028 = vadd.f32 %v916, %v1026
        %v1029 = vadd.f32 %v917, %v1027
        %s1030 = scalar_lea.vmem %s3, 336
        %v1031 = vld [vmem:[%s1030] sm:$0xf]
        %v1032 = vld [vmem:[%s1030 + $0x4] sm:$0xf]
        %v1033 = vld [vmem:[%s1030 + $0x8] sm:$0xf]
        %v1034 = vld [vmem:[%s1030 + $0xc] sm:$0xf]
        %v1035 = vld [vmem:[%s1030 + $0x10] sm:$0xf]
        %v1036 = vld [vmem:[%s1030 + $0x14] sm:$0xf]
        %v1037 = vld [vmem:[%s1030 + $0x18] sm:$0xf]
        %v1038 = vld [vmem:[%s1030 + $0x1c] sm:$0xf]
        %v1039 = vld [vmem:[%s1030 + $0x20] sm:$0xf]
        %v1040 = vld [vmem:[%s1030 + $0x24] sm:$0xf]
        %v1041 = vld [vmem:[%s1030 + $0x28] sm:$0xf]
        %v1042 = vld [vmem:[%s1030 + $0x2c] sm:$0xf]
        %v1043 = vld [vmem:[%s1030 + $0x30] sm:$0xf]
        %v1044 = vld [vmem:[%s1030 + $0x34] sm:$0x3]
        %v1059 = vunpack.c.l.b16 %v1031
        %v1060 = vunpack.c.l.b16 %v1032
        %v1061 = vunpack.c.l.b16 %v1033
        %v1062 = vunpack.c.l.b16 %v1034
        %v1063 = vunpack.c.l.b16 %v1035
        %v1064 = vunpack.c.l.b16 %v1036
        %v1065 = vunpack.c.l.b16 %v1037
        %v1066 = vunpack.c.l.b16 %v1038
        %v1067 = vunpack.c.l.b16 %v1039
        %v1068 = vunpack.c.l.b16 %v1040
        %v1069 = vunpack.c.l.b16 %v1041
        %v1070 = vunpack.c.l.b16 %v1042
        %v1071 = vunpack.c.l.b16 %v1043
        %v1072 = vunpack.c.l.b16 %v1044
        %v1073 = vpack.c.b16 %v1060, %v1059
        %v1074 = vpack.c.b16 %v1062, %v1061
        %v1075 = vpack.c.b16 %v1064, %v1063
        %v1076 = vpack.c.b16 %v1066, %v1065
        %v1077 = vpack.c.b16 %v1068, %v1067
        %v1078 = vpack.c.b16 %v1070, %v1069
        %v1079 = vpack.c.b16 %v1072, %v1071
        %v1087 = vsel %vm411, %v1079, 0
        %1089 = vmatprep.subr.bf16.mxu0 0
        %1090 = vmatpush1.bf16.msra.mxu0 %v1073
        %1091 = vmatprep.subr.bf16.mxu0 0
        %1092 = vmatpush1.bf16.msra.mxu0 %v1074
        %1093 = vmatprep.subr.bf16.mxu0 0
        %1094 = vmatpush1.bf16.msra.mxu0 %v1075
        %1095 = vmatprep.subr.bf16.mxu0 0
        %1096 = vmatpush1.bf16.msra.mxu0 %v1076
        %1097 = vmatprep.subr.bf16.mxu0 0
        %1098 = vmatpush1.bf16.msra.mxu0 %v1077
        %1099 = vmatprep.subr.bf16.mxu0 0
        %1100 = vmatpush1.bf16.msra.mxu0 %v1078
        %1101 = vmatprep.subr.bf16.mxu0 0
        %1102 = vmatpush1.bf16.msra.mxu0 %v1087
        %1103 = vmatprep.subr.bf16.mxu0 0
        %1104 = vmatpush1.bf16.msra.mxu0 0
        %1105 = vmatprep.subr.bf16.mxu0 0
        %1106 = vmatpush1.bf16.msra.mxu0 0
        %1107 = vmatprep.subr.bf16.mxu0 0
        %1108 = vmatpush1.bf16.msra.mxu0 0
        %1109 = vmatprep.subr.bf16.mxu0 0
        %1110 = vmatpush1.bf16.msra.mxu0 0
        %1111 = vmatprep.subr.bf16.mxu0 0
        %1112 = vmatpush1.bf16.msra.mxu0 0
        %1113 = vmatprep.subr.bf16.mxu0 0
        %1114 = vmatpush1.bf16.msra.mxu0 0
        %1115 = vmatprep.subr.bf16.mxu0 0
        %1116 = vmatpush1.bf16.msra.mxu0 0
        %1117 = vmatprep.subr.bf16.mxu0 0
        %1118 = vmatpush1.bf16.msra.mxu0 0
        %1119 = vmatprep.subr.bf16.mxu0 0
        %1120 = vmatpush1.bf16.msra.mxu0 0
        %1121 = vmatprep.mubr.bf16.mxu0 0
        %1122 = vmatmul.mubr.bf16.gmra.mrb[0].mxu0 %v409
        %v1123 = vpop.f32.mrb[0].mxu0
        %v1124 = vadd.f32 0.0, %v1123
        %v1125 = vpop.f32.mrb[0].mxu0
        %v1126 = vpop.f32.mrb[0].mxu0
        %v1127 = vadd.f32 0.0, %v1126
        %v1128 = vpop.f32.mrb[0].mxu0
        %1129 = vdwg.mxu0
        %1130 = vset.pattern.permute.xlu0 6
        %1131 = vperm.xlu0 %1130, %v349
        %v1132 = vpop.permute.xlu0 %1131
        %1134 = vset.pattern.permute.xlu0 6
        %1135 = vperm.xlu0 %1134, %v350
        %v1136 = vpop.permute.xlu0 %1135
        %v1138 = vmul.f32 %v1132, %v1124
        %v1139 = vmul.f32 %v1136, %v1127
        %v1140 = vadd.f32 %v1028, %v1138
        %v1141 = vadd.f32 %v1029, %v1139
        %s1142 = scalar_lea.vmem %s3, 392
        %v1143 = vld [vmem:[%s1142] sm:$0xf]
        %v1144 = vld [vmem:[%s1142 + $0x4] sm:$0xf]
        %v1145 = vld [vmem:[%s1142 + $0x8] sm:$0xf]
        %v1146 = vld [vmem:[%s1142 + $0xc] sm:$0xf]
        %v1147 = vld [vmem:[%s1142 + $0x10] sm:$0xf]
        %v1148 = vld [vmem:[%s1142 + $0x14] sm:$0xf]
        %v1149 = vld [vmem:[%s1142 + $0x18] sm:$0xf]
        %v1150 = vld [vmem:[%s1142 + $0x1c] sm:$0xf]
        %v1151 = vld [vmem:[%s1142 + $0x20] sm:$0xf]
        %v1152 = vld [vmem:[%s1142 + $0x24] sm:$0xf]
        %v1153 = vld [vmem:[%s1142 + $0x28] sm:$0xf]
        %v1154 = vld [vmem:[%s1142 + $0x2c] sm:$0xf]
        %v1155 = vld [vmem:[%s1142 + $0x30] sm:$0xf]
        %v1156 = vld [vmem:[%s1142 + $0x34] sm:$0x3]
        %v1171 = vunpack.c.l.b16 %v1143
        %v1172 = vunpack.c.l.b16 %v1144
        %v1173 = vunpack.c.l.b16 %v1145
        %v1174 = vunpack.c.l.b16 %v1146
        %v1175 = vunpack.c.l.b16 %v1147
        %v1176 = vunpack.c.l.b16 %v1148
        %v1177 = vunpack.c.l.b16 %v1149
        %v1178 = vunpack.c.l.b16 %v1150
        %v1179 = vunpack.c.l.b16 %v1151
        %v1180 = vunpack.c.l.b16 %v1152
        %v1181 = vunpack.c.l.b16 %v1153
        %v1182 = vunpack.c.l.b16 %v1154
        %v1183 = vunpack.c.l.b16 %v1155
        %v1184 = vunpack.c.l.b16 %v1156
        %v1185 = vpack.c.b16 %v1172, %v1171
        %v1186 = vpack.c.b16 %v1174, %v1173
        %v1187 = vpack.c.b16 %v1176, %v1175
        %v1188 = vpack.c.b16 %v1178, %v1177
        %v1189 = vpack.c.b16 %v1180, %v1179
        %v1190 = vpack.c.b16 %v1182, %v1181
        %v1191 = vpack.c.b16 %v1184, %v1183
        %v1199 = vsel %vm411, %v1191, 0
        %1201 = vmatprep.subr.bf16.mxu0 0
        %1202 = vmatpush1.bf16.msra.mxu0 %v1185
        %1203 = vmatprep.subr.bf16.mxu0 0
        %1204 = vmatpush1.bf16.msra.mxu0 %v1186
        %1205 = vmatprep.subr.bf16.mxu0 0
        %1206 = vmatpush1.bf16.msra.mxu0 %v1187
        %1207 = vmatprep.subr.bf16.mxu0 0
        %1208 = vmatpush1.bf16.msra.mxu0 %v1188
        %1209 = vmatprep.subr.bf16.mxu0 0
        %1210 = vmatpush1.bf16.msra.mxu0 %v1189
        %1211 = vmatprep.subr.bf16.mxu0 0
        %1212 = vmatpush1.bf16.msra.mxu0 %v1190
        %1213 = vmatprep.subr.bf16.mxu0 0
        %1214 = vmatpush1.bf16.msra.mxu0 %v1199
        %1215 = vmatprep.subr.bf16.mxu0 0
        %1216 = vmatpush1.bf16.msra.mxu0 0
        %1217 = vmatprep.subr.bf16.mxu0 0
        %1218 = vmatpush1.bf16.msra.mxu0 0
        %1219 = vmatprep.subr.bf16.mxu0 0
        %1220 = vmatpush1.bf16.msra.mxu0 0
        %1221 = vmatprep.subr.bf16.mxu0 0
        %1222 = vmatpush1.bf16.msra.mxu0 0
        %1223 = vmatprep.subr.bf16.mxu0 0
        %1224 = vmatpush1.bf16.msra.mxu0 0
        %1225 = vmatprep.subr.bf16.mxu0 0
        %1226 = vmatpush1.bf16.msra.mxu0 0
        %1227 = vmatprep.subr.bf16.mxu0 0
        %1228 = vmatpush1.bf16.msra.mxu0 0
        %1229 = vmatprep.subr.bf16.mxu0 0
        %1230 = vmatpush1.bf16.msra.mxu0 0
        %1231 = vmatprep.subr.bf16.mxu0 0
        %1232 = vmatpush1.bf16.msra.mxu0 0
        %1233 = vmatprep.mubr.bf16.mxu0 0
        %1234 = vmatmul.mubr.bf16.gmra.mrb[0].mxu0 %v409
        %v1235 = vpop.f32.mrb[0].mxu0
        %v1236 = vadd.f32 0.0, %v1235
        %v1237 = vpop.f32.mrb[0].mxu0
        %v1238 = vpop.f32.mrb[0].mxu0
        %v1239 = vadd.f32 0.0, %v1238
        %v1240 = vpop.f32.mrb[0].mxu0
        %1241 = vdwg.mxu0
        %1242 = vset.pattern.permute.xlu0 7
        %1243 = vperm.xlu0 %1242, %v349
        %v1244 = vpop.permute.xlu0 %1243
        %1246 = vset.pattern.permute.xlu0 7
        %1247 = vperm.xlu0 %1246, %v350
        %v1248 = vpop.permute.xlu0 %1247
        %v1250 = vmul.f32 %v1244, %v1236
        %v1251 = vmul.f32 %v1248, %v1239
        %v1252 = vadd.f32 %v1140, %v1250
        %v1253 = vadd.f32 %v1141, %v1251
        %v1254 = vxor.u32 %v1252, 2147483648
        %v1255 = vxor.u32 %v1253, 2147483648
        %v1256 = vmul.f32 %v1254, 1.442695
        %v1257 = vpow.pop %v1256
        %v1258 = vmul.f32 %v1255, 1.442695
        %v1259 = vpow.pop %v1258
        %v1260 = vadd.f32 %v1257, 1.0
        %v1261 = vadd.f32 %v1259, 1.0
        %v1262 = vrcp.pop %v1260
        %v1263 = vmul.f32 1.0, %v1262
        %v1264 = vrcp.pop %v1261
        %v1265 = vmul.f32 1.0, %v1264
        %v1266 = vtanh.pop %v1252
        %v1267 = vtanh.pop %v1253
        %v1268 = vsub.f32 1.0, %v1263
        %v1269 = vsub.f32 1.0, %v1265
        %1272 = vrot.lane.b32.xlu0 %v227, 124
        %v1273 = vpop.permute.xlu0 %1272
        %1274 = vrot.lane.b32.xlu0 %v228, 124
        %v1275 = vpop.permute.xlu0 %1274
        %v1278 = vmul.f32 %v1268, %v1273
        %v1279 = vmul.f32 %v1269, %v1275
        %1282 = vrot.lane.b32.xlu0 %v1266, 96
        %v1283 = vpop.permute.xlu0 %1282
        %1284 = vrot.lane.b32.xlu0 %v1267, 96
        %v1285 = vpop.permute.xlu0 %1284
        %v1288 = vmul.f32 %v1263, %v1283
        %v1289 = vmul.f32 %v1265, %v1285
        %v1290 = vadd.f32 %v1278, %v1288
        %v1291 = vadd.f32 %v1279, %v1289
        %vm1292 = vcmask 261120
        %1293 = vst.msk [vmem:[%s218] sm:$0xff] %vm1292, %v1290
        %1294 = vst.msk [vmem:[%s218 + $0x8] sm:$0xff] %vm1292, %v1291
        %s1295 = sand.u32 %s137, 1
        %s1296 = scalar_lea.sflag [#allocation3], %s1295
        %s1297 = sand.u32 %s137, 1
        %s1298 = smul.addr %s1297, 16
        %s1299 = scalar_lea.vmem [#allocation2], %s1298
        // Predicated region
        $region41: #{hhagcrn_cell.1} parent=39 // pred_check
          %p1300 = pneg %p147
        $region42: #{hhagcrn_cell.1} parent=39 // pred_check_branch
          %1302 = sbr.rel (%p1300) target = $region44
        $region43: #{hhagcrn_cell.1} parent=39 // pred_region
          %s1303 = smul.u32 2, %s19
          %s1305 = ssub.s32 256, 256
          %1306 = vsyncadd %s1296, %s1305
          %s1307 = smul.addr %s1303, 128
          %s1308 = scalar_lea.hbm %s5, %s1307
          %s1309 = sshll.u32 %s1299, 4
          %s1310 = int_to_ptr.vmem [resolvable:$true] %s1309
          %1315 = dma.vmem_to_hbm [thread:$0]  %s1310, 256, %s1308, %s1296, 128, 128, 8
        $region44: #{hhagcrn_cell.1} parent=39 // pred_fallthru
          _
      $region40: #{hhagcrn_cell.1} parent=5 // pred_fallthru
        _
      %p1316 = scmp.le.s32.totalorder 2, %s14
      // Predicated region
      $region45: #{hhagcrn_cell.1} parent=5 // pred_check
        %p1317 = pneg %p1316
      $region46: #{hhagcrn_cell.1} parent=5 // pred_check_branch
        %1319 = sbr.rel (%p1317) target = $region48
      $region47: #{hhagcrn_cell.1} parent=5 // pred_region
        %s1320 = ssub.s32 %s14, 2
        // Predicated region
        $region49: #{hhagcrn_cell.1} parent=47 // pred_check
          %p1321 = pneg %p153
        $region50: #{hhagcrn_cell.1} parent=47 // pred_check_branch
          %1323 = sbr.rel (%p1321) target = $region52
        $region51: #{hhagcrn_cell.1} parent=47 // pred_region
          %s1324 = sand.u32 %s138, 1
          %s1325 = scalar_lea.sflag [#allocation3], %s1324
          %s1326 = sand.u32 %s138, 1
          %s1327 = smul.addr %s1326, 16
          %s1328 = scalar_lea.vmem [#allocation2], %s1327
          %1329 = dma.done %s1325, 256
        $region52: #{hhagcrn_cell.1} parent=47 // pred_fallthru
          _
      $region48: #{hhagcrn_cell.1} parent=5 // pred_fallthru
        _
    $region6: #{hhagcrn_cell.1} parent=1 // loop_footer
      %s18 = sadd.s32 1, %s14
    $region7: #{hhagcrn_cell.1} parent=1 // loop_footer_branch
      %13 = sbr.rel target = $region3
    $region8: #{hhagcrn_cell.1} parent=1 // loop_exit
      _
    %1330 = vsyncpa [#allocation3], 1
    %s1331 = scalar_lea.sflag [#allocation3], 1
    %1332 = vsyncpa %s1331, 1

</llo_original>
